<compile_context>
chip_gen: v6e
topology: v6e:2x2x1
jax: 0.10.0
libtpu: 0.0.40
codegen_flags: <defaults>
</compile_context>

<pallas_src>
import functools

import jax
import jax.numpy as jnp
from jax import lax
from jax.experimental import pallas as pl
from jax.experimental.pallas import tpu as pltpu


# --------------------------------------------------------------------------
# In-kernel helpers: scatter matrices for the all-ones transposed conv
# --------------------------------------------------------------------------
def _row_scatter(out_size, in_size, kernel, stride):
    """(out_size, in_size): A[y, i] = 1 iff i*stride <= y < i*stride + kernel."""
    y = lax.broadcasted_iota(jnp.int32, (out_size, in_size), 0)
    i = lax.broadcasted_iota(jnp.int32, (out_size, in_size), 1)
    return jnp.where((y >= i * stride) & (y < i * stride + kernel),
                     1.0, 0.0).astype(jnp.float32)


def _col_scatter_t(out_size, in_size, kernel, stride):
    """(in_size, out_size): A^T[j, x] = 1 iff j*stride <= x < j*stride + kernel."""
    x = lax.broadcasted_iota(jnp.int32, (in_size, out_size), 1)
    j = lax.broadcasted_iota(jnp.int32, (in_size, out_size), 0)
    return jnp.where((x >= j * stride) & (x < j * stride + kernel),
                     1.0, 0.0).astype(jnp.float32)


# --------------------------------------------------------------------------
# Fused kernel: all backward layers, full batch, one launch
# --------------------------------------------------------------------------
def _fused_backward_kernel(layer_cfgs, spatial_in, n_batch, *refs):
    """refs = (act_rev_0, ..., act_rev_{L-1}, out).

    act_rev_l : (N, C_l, H_l, W_l) raw activation consumed by backward layer l
                (activations in reversed forward order, whole arrays in VMEM).
    out       : (N, cout, Ho, Wo)  final normalized map; all channels equal.
    """
    act_refs = refs[:-1]
    out_ref = refs[-1]
    cout = layer_cfgs[-1]["out_channels"]

    # Scatter matrices for every layer, built ONCE per launch (single grid
    # step) from iotas -- a few vregs of VPU work, amortized over the batch.
    h, w = spatial_in
    mats = []
    for cfg in layer_cfgs:
        k, s = cfg["kernel"], cfg["stride"]
        ho = (h - 1) * s + k
        wo = (w - 1) * s + k
        mats.append((_row_scatter(ho, h, k, s),      # (Ho, H)
                     _col_scatter_t(wo, w, k, s)))   # (W, Wo)
        h, w = ho, wo

    @pl.loop(0, n_batch)          # bounds per-sample live ranges (no spills)
    def _per_sample(b):
        # Backward layer 0 input: ones * act  =>  channel sum of act.
        z = jnp.sum(act_refs[0][b].astype(jnp.float32), axis=0)   # (H0, W0)
        t = None
        for l, cfg in enumerate(layer_cfgs):      # static unroll over layers
            ah, awt = mats[l]
            # All-ones transposed conv == A_h @ z @ A_w^T (two tiny MXU dots).
            u = jnp.dot(jnp.dot(ah, z, preferred_element_type=jnp.float32),
                        awt, preferred_element_type=jnp.float32)  # (Ho, Wo)
            # Spatial min/max normalization (all output channels identical).
            umin = jnp.min(jnp.min(u, axis=-1, keepdims=True), axis=-2,
                           keepdims=True)                         # (1, 1)
            umax = jnp.max(jnp.max(u, axis=-1, keepdims=True), axis=-2,
                           keepdims=True)                         # (1, 1)
            inv = 1.0 / (umax - umin)      # exact; one scalar per layer
            t = (u - umin) * inv
            if l + 1 < len(layer_cfgs):
                z = t * jnp.sum(act_refs[l + 1][b].astype(jnp.float32), axis=0)
        # Write the cout identical channel copies straight from the kernel.
        out_ref[b] = jnp.broadcast_to(t[None], (cout,) + t.shape
                                      ).astype(out_ref.dtype)


# --------------------------------------------------------------------------
# Wrapper
# --------------------------------------------------------------------------
def backward_pilot_net(activations, layer_cfgs):
    """JAX/Pallas equivalent of BackwardPilotNet.forward.

    `activations` are in forward order (as in the PyTorch module); only the
    last len(layer_cfgs) of them are consumed, in reversed order.
    """
    num_layers = len(layer_cfgs)
    acts_rev = [a.astype(jnp.float32)
                for a in list(reversed(activations))[:num_layers]]

    n, _, h, w = acts_rev[0].shape
    # The scatter-matrix formulation assumes ConvTranspose2d with padding=0,
    # output_padding=0, dilation=1, all-ones weights and zero bias, and the
    # standard backward wiring (reversed(activations)[l+1] matches the output
    # of backward layer l).  Guard those assumptions so a config change does
    # not silently produce wrong results.
    hh, ww = h, w
    for l, cfg in enumerate(layer_cfgs):
        assert cfg["kernel"] >= 1 and cfg["stride"] >= 1, cfg
        hh = (hh - 1) * cfg["stride"] + cfg["kernel"]
        ww = (ww - 1) * cfg["stride"] + cfg["kernel"]
        if l + 1 < num_layers:
            expect = (n, cfg["out_channels"], hh, ww)
            assert acts_rev[l + 1].shape == expect, (acts_rev[l + 1].shape,
                                                     expect)
    ho, wo = hh, ww
    cout = layer_cfgs[-1]["out_channels"]

    kernel = functools.partial(_fused_backward_kernel, layer_cfgs, (h, w), n)
    vmem = pl.BlockSpec(memory_space=pltpu.MemorySpace.VMEM)

    # Single grid step: whole (tiny) arrays live in VMEM, the batch loop and
    # all three layers run inside one launch, intermediates never touch HBM.
    return pl.pallas_call(
        kernel,
        out_shape=jax.ShapeDtypeStruct((n, cout, ho, wo), jnp.float32),
        in_specs=[vmem] * num_layers,
        out_specs=vmem,
    )(*acts_rev)


# --------------------------------------------------------------------------
# Pure-JAX reference: faithful (full-channel) translation of the module
# --------------------------------------------------------------------------
def _convT_ones_ref(z, kernel, stride):
    n, c, h, w = z.shape
    ho = (h - 1) * stride + kernel
    wo = (w - 1) * stride + kernel
    out = jnp.zeros((n, ho, wo), z.dtype)
    zc = jnp.sum(z, axis=1)
    for dy in range(kernel):
        for dx in range(kernel):
            out = out.at[:,
                         dy:dy + (h - 1) * stride + 1:stride,
                         dx:dx + (w - 1) * stride + 1:stride].add(zc)
    return out


def _ref_forward(activations, layer_cfgs):
    last = jnp.ones_like(activations[-1])
    for cfg, act in zip(layer_cfgs, reversed(activations)):
        m = last * act
        t = _convT_ones_ref(m, cfg["kernel"], cfg["stride"])     # (N, Ho, Wo)
        out = jnp.broadcast_to(
            t[:, None], (t.shape[0], cfg["out_channels"], t.shape[1],
                         t.shape[2]))
        omin = out.min(axis=(2, 3), keepdims=True)
        omax = out.max(axis=(2, 3), keepdims=True)
        last = (out - omin) / (omax - omin)
    return last


# --------------------------------------------------------------------------
if __name__ == "__main__":
    key = jax.random.PRNGKey(0)

    # Synthetic config (plays the role of cfg.MODEL.BACKWARD_CNN).
    batch = 2
    input_channels = 8
    layer_cfgs = [
        dict(out_channels=6, kernel=3, stride=2),
        dict(out_channels=4, kernel=3, stride=2),
        dict(out_channels=3, kernel=5, stride=2),
    ]

    # Activation shapes consistent with the backward wiring:
    # reversed(activations)[l] multiplies the output of backward layer l-1.
    shapes_rev = []
    c, h, w = input_channels, 6, 6
    for cfg in layer_cfgs:
        shapes_rev.append((batch, c, h, w))
        c = cfg["out_channels"]
        h = (h - 1) * cfg["stride"] + cfg["kernel"]
        w = (w - 1) * cfg["stride"] + cfg["kernel"]

    activations = []
    for shape in reversed(shapes_rev):   # stored in forward order
        key, sub = jax.random.split(key)
        activations.append(
            jax.random.uniform(sub, shape, jnp.float32, 0.5, 1.5))

    fwd = jax.jit(lambda *acts: backward_pilot_net(list(acts), layer_cfgs))
    out = jax.block_until_ready(fwd(*activations))

    ref = _ref_forward(activations, layer_cfgs)
    assert out.shape == ref.shape, (out.shape, ref.shape)
    # Reciprocal is exact now; residual deviation is only the MXU's f32
    # multi-pass accumulation order vs. the reference's scatter-add chain,
    # so the tolerance is tightened from 5e-3 to 2e-3.
    err = float(jnp.max(jnp.abs(out - ref)))
    assert jnp.allclose(out, ref, rtol=2e-3, atol=2e-3), err

    print("KERNEL_OK")
</pallas_src>

<mosaic_0001>
module attributes {stable_mosaic.version = 11 : i64} {
  func.func @_fused_backward_kernel(%arg0: memref<2x8x6x6xf32, #tpu.memory_space<vmem>>, %arg1: memref<2x6x13x13xf32, #tpu.memory_space<vmem>>, %arg2: memref<2x4x27x27xf32, #tpu.memory_space<vmem>>, %arg3: memref<2x3x57x57xf32, #tpu.memory_space<vmem>>) attributes {dimension_semantics = [], scalar_prefetch = 0 : i64, scratch_operands = 0 : i64, tpu.core_type = #tpu.core_type<tc>} {
    %0 = tpu.iota {dimensions = array<i32: 0>} : vector<13x6xi32>
    %1 = tpu.iota {dimensions = array<i32: 1>} : vector<13x6xi32>
    %c2_i32 = arith.constant 2 : i32
    %2 = vector.broadcast %c2_i32 : i32 to vector<13x6xi32>
    %3 = arith.muli %1, %2 : vector<13x6xi32>
    %4 = arith.cmpi sge, %0, %3 : vector<13x6xi32>
    %c2_i32_0 = arith.constant 2 : i32
    %5 = vector.broadcast %c2_i32_0 : i32 to vector<13x6xi32>
    %6 = arith.muli %1, %5 : vector<13x6xi32>
    %c3_i32 = arith.constant 3 : i32
    %7 = vector.broadcast %c3_i32 : i32 to vector<13x6xi32>
    %8 = arith.addi %6, %7 : vector<13x6xi32>
    %9 = arith.cmpi slt, %0, %8 : vector<13x6xi32>
    %10 = arith.andi %4, %9 : vector<13x6xi1>
    %cst = arith.constant 1.000000e+00 : f32
    %cst_1 = arith.constant 0.000000e+00 : f32
    %11 = vector.broadcast %cst : f32 to vector<13x6xf32>
    %12 = vector.broadcast %cst_1 : f32 to vector<13x6xf32>
    %13 = arith.select %10, %11, %12 : vector<13x6xi1>, vector<13x6xf32>
    %14 = tpu.iota {dimensions = array<i32: 1>} : vector<6x13xi32>
    %15 = tpu.iota {dimensions = array<i32: 0>} : vector<6x13xi32>
    %c2_i32_2 = arith.constant 2 : i32
    %16 = vector.broadcast %c2_i32_2 : i32 to vector<6x13xi32>
    %17 = arith.muli %15, %16 : vector<6x13xi32>
    %18 = arith.cmpi sge, %14, %17 : vector<6x13xi32>
    %c2_i32_3 = arith.constant 2 : i32
    %19 = vector.broadcast %c2_i32_3 : i32 to vector<6x13xi32>
    %20 = arith.muli %15, %19 : vector<6x13xi32>
    %c3_i32_4 = arith.constant 3 : i32
    %21 = vector.broadcast %c3_i32_4 : i32 to vector<6x13xi32>
    %22 = arith.addi %20, %21 : vector<6x13xi32>
    %23 = arith.cmpi slt, %14, %22 : vector<6x13xi32>
    %24 = arith.andi %18, %23 : vector<6x13xi1>
    %cst_5 = arith.constant 1.000000e+00 : f32
    %cst_6 = arith.constant 0.000000e+00 : f32
    %25 = vector.broadcast %cst_5 : f32 to vector<6x13xf32>
    %26 = vector.broadcast %cst_6 : f32 to vector<6x13xf32>
    %27 = arith.select %24, %25, %26 : vector<6x13xi1>, vector<6x13xf32>
    %28 = tpu.iota {dimensions = array<i32: 0>} : vector<27x13xi32>
    %29 = tpu.iota {dimensions = array<i32: 1>} : vector<27x13xi32>
    %c2_i32_7 = arith.constant 2 : i32
    %30 = vector.broadcast %c2_i32_7 : i32 to vector<27x13xi32>
    %31 = arith.muli %29, %30 : vector<27x13xi32>
    %32 = arith.cmpi sge, %28, %31 : vector<27x13xi32>
    %c2_i32_8 = arith.constant 2 : i32
    %33 = vector.broadcast %c2_i32_8 : i32 to vector<27x13xi32>
    %34 = arith.muli %29, %33 : vector<27x13xi32>
    %c3_i32_9 = arith.constant 3 : i32
    %35 = vector.broadcast %c3_i32_9 : i32 to vector<27x13xi32>
    %36 = arith.addi %34, %35 : vector<27x13xi32>
    %37 = arith.cmpi slt, %28, %36 : vector<27x13xi32>
    %38 = arith.andi %32, %37 : vector<27x13xi1>
    %cst_10 = arith.constant 1.000000e+00 : f32
    %cst_11 = arith.constant 0.000000e+00 : f32
    %39 = vector.broadcast %cst_10 : f32 to vector<27x13xf32>
    %40 = vector.broadcast %cst_11 : f32 to vector<27x13xf32>
    %41 = arith.select %38, %39, %40 : vector<27x13xi1>, vector<27x13xf32>
    %42 = tpu.iota {dimensions = array<i32: 1>} : vector<13x27xi32>
    %43 = tpu.iota {dimensions = array<i32: 0>} : vector<13x27xi32>
    %c2_i32_12 = arith.constant 2 : i32
    %44 = vector.broadcast %c2_i32_12 : i32 to vector<13x27xi32>
    %45 = arith.muli %43, %44 : vector<13x27xi32>
    %46 = arith.cmpi sge, %42, %45 : vector<13x27xi32>
    %c2_i32_13 = arith.constant 2 : i32
    %47 = vector.broadcast %c2_i32_13 : i32 to vector<13x27xi32>
    %48 = arith.muli %43, %47 : vector<13x27xi32>
    %c3_i32_14 = arith.constant 3 : i32
    %49 = vector.broadcast %c3_i32_14 : i32 to vector<13x27xi32>
    %50 = arith.addi %48, %49 : vector<13x27xi32>
    %51 = arith.cmpi slt, %42, %50 : vector<13x27xi32>
    %52 = arith.andi %46, %51 : vector<13x27xi1>
    %cst_15 = arith.constant 1.000000e+00 : f32
    %cst_16 = arith.constant 0.000000e+00 : f32
    %53 = vector.broadcast %cst_15 : f32 to vector<13x27xf32>
    %54 = vector.broadcast %cst_16 : f32 to vector<13x27xf32>
    %55 = arith.select %52, %53, %54 : vector<13x27xi1>, vector<13x27xf32>
    %56 = tpu.iota {dimensions = array<i32: 0>} : vector<57x27xi32>
    %57 = tpu.iota {dimensions = array<i32: 1>} : vector<57x27xi32>
    %c2_i32_17 = arith.constant 2 : i32
    %58 = vector.broadcast %c2_i32_17 : i32 to vector<57x27xi32>
    %59 = arith.muli %57, %58 : vector<57x27xi32>
    %60 = arith.cmpi sge, %56, %59 : vector<57x27xi32>
    %c2_i32_18 = arith.constant 2 : i32
    %61 = vector.broadcast %c2_i32_18 : i32 to vector<57x27xi32>
    %62 = arith.muli %57, %61 : vector<57x27xi32>
    %c5_i32 = arith.constant 5 : i32
    %63 = vector.broadcast %c5_i32 : i32 to vector<57x27xi32>
    %64 = arith.addi %62, %63 : vector<57x27xi32>
    %65 = arith.cmpi slt, %56, %64 : vector<57x27xi32>
    %66 = arith.andi %60, %65 : vector<57x27xi1>
    %cst_19 = arith.constant 1.000000e+00 : f32
    %cst_20 = arith.constant 0.000000e+00 : f32
    %67 = vector.broadcast %cst_19 : f32 to vector<57x27xf32>
    %68 = vector.broadcast %cst_20 : f32 to vector<57x27xf32>
    %69 = arith.select %66, %67, %68 : vector<57x27xi1>, vector<57x27xf32>
    %70 = tpu.iota {dimensions = array<i32: 1>} : vector<27x57xi32>
    %71 = tpu.iota {dimensions = array<i32: 0>} : vector<27x57xi32>
    %c2_i32_21 = arith.constant 2 : i32
    %72 = vector.broadcast %c2_i32_21 : i32 to vector<27x57xi32>
    %73 = arith.muli %71, %72 : vector<27x57xi32>
    %74 = arith.cmpi sge, %70, %73 : vector<27x57xi32>
    %c2_i32_22 = arith.constant 2 : i32
    %75 = vector.broadcast %c2_i32_22 : i32 to vector<27x57xi32>
    %76 = arith.muli %71, %75 : vector<27x57xi32>
    %c5_i32_23 = arith.constant 5 : i32
    %77 = vector.broadcast %c5_i32_23 : i32 to vector<27x57xi32>
    %78 = arith.addi %76, %77 : vector<27x57xi32>
    %79 = arith.cmpi slt, %70, %78 : vector<27x57xi32>
    %80 = arith.andi %74, %79 : vector<27x57xi1>
    %cst_24 = arith.constant 1.000000e+00 : f32
    %cst_25 = arith.constant 0.000000e+00 : f32
    %81 = vector.broadcast %cst_24 : f32 to vector<27x57xf32>
    %82 = vector.broadcast %cst_25 : f32 to vector<27x57xf32>
    %83 = arith.select %80, %81, %82 : vector<27x57xi1>, vector<27x57xf32>
    %c0_i32 = arith.constant 0 : i32
    %c2_i32_26 = arith.constant 2 : i32
    %84 = arith.addi %c0_i32, %c2_i32_26 : i32
    %c1_i32 = arith.constant 1 : i32
    scf.for %arg4 = %c0_i32 to %84 step %c1_i32  : i32 {
      %c1_i32_28 = arith.constant 1 : i32
      %85 = arith.muli %arg4, %c1_i32_28 : i32
      %c0_i32_29 = arith.constant 0 : i32
      %86 = arith.addi %c0_i32_29, %85 : i32
      %87 = arith.index_cast %86 : i32 to index
      %c0 = arith.constant 0 : index
      %c0_30 = arith.constant 0 : index
      %c0_31 = arith.constant 0 : index
      %88 = vector.load %arg0[%87, %c0, %c0_30, %c0_31] : memref<2x8x6x6xf32, #tpu.memory_space<vmem>>, vector<1x8x6x6xf32>
      %89 = vector.shape_cast %88 : vector<1x8x6x6xf32> to vector<8x6x6xf32>
      %cst_32 = arith.constant dense<0.000000e+00> : vector<6x6xf32>
      %90 = vector.multi_reduction <add>, %89, %cst_32 [0] : vector<8x6x6xf32> to vector<6x6xf32>
      %cst_33 = arith.constant dense<0.000000e+00> : vector<13x6xf32>
      %91 = tpu.matmul %13, %90, %cst_33 {dimension_numbers = #tpu.dot_dimension_numbers<[1], [0], [0], [1], [0, 0, 1, 1], [], []>} : vector<13x6xf32>, vector<6x6xf32>, vector<13x6xf32> -> vector<13x6xf32>
      %cst_34 = arith.constant dense<0.000000e+00> : vector<13x13xf32>
      %92 = tpu.matmul %91, %27, %cst_34 {dimension_numbers = #tpu.dot_dimension_numbers<[1], [0], [0], [1], [0, 0, 1, 1], [], []>} : vector<13x6xf32>, vector<6x13xf32>, vector<13x13xf32> -> vector<13x13xf32>
      %cst_35 = arith.constant dense<0x7F800000> : vector<13xf32>
      %93 = vector.multi_reduction <minimumf>, %92, %cst_35 [1] : vector<13x13xf32> to vector<13xf32>
      %94 = vector.shape_cast %93 : vector<13xf32> to vector<13x1xf32>
      %cst_36 = arith.constant dense<0x7F800000> : vector<1xf32>
      %95 = vector.multi_reduction <minimumf>, %94, %cst_36 [0] : vector<13x1xf32> to vector<1xf32>
      %96 = vector.shape_cast %95 : vector<1xf32> to vector<1x1xf32>
      %cst_37 = arith.constant dense<0xFF800000> : vector<13xf32>
      %97 = vector.multi_reduction <maximumf>, %92, %cst_37 [1] : vector<13x13xf32> to vector<13xf32>
      %98 = vector.shape_cast %97 : vector<13xf32> to vector<13x1xf32>
      %cst_38 = arith.constant dense<0xFF800000> : vector<1xf32>
      %99 = vector.multi_reduction <maximumf>, %98, %cst_38 [0] : vector<13x1xf32> to vector<1xf32>
      %100 = vector.shape_cast %99 : vector<1xf32> to vector<1x1xf32>
      %101 = arith.subf %100, %96 : vector<1x1xf32>
      %cst_39 = arith.constant 1.000000e+00 : f32
      %102 = vector.broadcast %cst_39 : f32 to vector<1x1xf32>
      %103 = arith.divf %102, %101 : vector<1x1xf32>
      %104 = vector.broadcast %96 : vector<1x1xf32> to vector<13x13xf32>
      %105 = arith.subf %92, %104 : vector<13x13xf32>
      %106 = vector.broadcast %103 : vector<1x1xf32> to vector<13x13xf32>
      %107 = arith.mulf %105, %106 : vector<13x13xf32>
      %108 = arith.index_cast %86 : i32 to index
      %c0_40 = arith.constant 0 : index
      %c0_41 = arith.constant 0 : index
      %c0_42 = arith.constant 0 : index
      %109 = vector.load %arg1[%108, %c0_40, %c0_41, %c0_42] : memref<2x6x13x13xf32, #tpu.memory_space<vmem>>, vector<1x6x13x13xf32>
      %110 = vector.shape_cast %109 : vector<1x6x13x13xf32> to vector<6x13x13xf32>
      %cst_43 = arith.constant dense<0.000000e+00> : vector<13x13xf32>
      %111 = vector.multi_reduction <add>, %110, %cst_43 [0] : vector<6x13x13xf32> to vector<13x13xf32>
      %112 = arith.mulf %107, %111 : vector<13x13xf32>
      %cst_44 = arith.constant dense<0.000000e+00> : vector<27x13xf32>
      %113 = tpu.matmul %41, %112, %cst_44 {dimension_numbers = #tpu.dot_dimension_numbers<[1], [0], [0], [1], [0, 0, 1, 1], [], []>} : vector<27x13xf32>, vector<13x13xf32>, vector<27x13xf32> -> vector<27x13xf32>
      %cst_45 = arith.constant dense<0.000000e+00> : vector<27x27xf32>
      %114 = tpu.matmul %113, %55, %cst_45 {dimension_numbers = #tpu.dot_dimension_numbers<[1], [0], [0], [1], [0, 0, 1, 1], [], []>} : vector<27x13xf32>, vector<13x27xf32>, vector<27x27xf32> -> vector<27x27xf32>
      %cst_46 = arith.constant dense<0x7F800000> : vector<27xf32>
      %115 = vector.multi_reduction <minimumf>, %114, %cst_46 [1] : vector<27x27xf32> to vector<27xf32>
      %116 = vector.shape_cast %115 : vector<27xf32> to vector<27x1xf32>
      %cst_47 = arith.constant dense<0x7F800000> : vector<1xf32>
      %117 = vector.multi_reduction <minimumf>, %116, %cst_47 [0] : vector<27x1xf32> to vector<1xf32>
      %118 = vector.shape_cast %117 : vector<1xf32> to vector<1x1xf32>
      %cst_48 = arith.constant dense<0xFF800000> : vector<27xf32>
      %119 = vector.multi_reduction <maximumf>, %114, %cst_48 [1] : vector<27x27xf32> to vector<27xf32>
      %120 = vector.shape_cast %119 : vector<27xf32> to vector<27x1xf32>
      %cst_49 = arith.constant dense<0xFF800000> : vector<1xf32>
      %121 = vector.multi_reduction <maximumf>, %120, %cst_49 [0] : vector<27x1xf32> to vector<1xf32>
      %122 = vector.shape_cast %121 : vector<1xf32> to vector<1x1xf32>
      %123 = arith.subf %122, %118 : vector<1x1xf32>
      %cst_50 = arith.constant 1.000000e+00 : f32
      %124 = vector.broadcast %cst_50 : f32 to vector<1x1xf32>
      %125 = arith.divf %124, %123 : vector<1x1xf32>
      %126 = vector.broadcast %118 : vector<1x1xf32> to vector<27x27xf32>
      %127 = arith.subf %114, %126 : vector<27x27xf32>
      %128 = vector.broadcast %125 : vector<1x1xf32> to vector<27x27xf32>
      %129 = arith.mulf %127, %128 : vector<27x27xf32>
      %130 = arith.index_cast %86 : i32 to index
      %c0_51 = arith.constant 0 : index
      %c0_52 = arith.constant 0 : index
      %c0_53 = arith.constant 0 : index
      %131 = vector.load %arg2[%130, %c0_51, %c0_52, %c0_53] : memref<2x4x27x27xf32, #tpu.memory_space<vmem>>, vector<1x4x27x27xf32>
      %132 = vector.shape_cast %131 : vector<1x4x27x27xf32> to vector<4x27x27xf32>
      %cst_54 = arith.constant dense<0.000000e+00> : vector<27x27xf32>
      %133 = vector.multi_reduction <add>, %132, %cst_54 [0] : vector<4x27x27xf32> to vector<27x27xf32>
      %134 = arith.mulf %129, %133 : vector<27x27xf32>
      %cst_55 = arith.constant dense<0.000000e+00> : vector<57x27xf32>
      %135 = tpu.matmul %69, %134, %cst_55 {dimension_numbers = #tpu.dot_dimension_numbers<[1], [0], [0], [1], [0, 0, 1, 1], [], []>} : vector<57x27xf32>, vector<27x27xf32>, vector<57x27xf32> -> vector<57x27xf32>
      %cst_56 = arith.constant dense<0.000000e+00> : vector<57x57xf32>
      %136 = tpu.matmul %135, %83, %cst_56 {dimension_numbers = #tpu.dot_dimension_numbers<[1], [0], [0], [1], [0, 0, 1, 1], [], []>} : vector<57x27xf32>, vector<27x57xf32>, vector<57x57xf32> -> vector<57x57xf32>
      %cst_57 = arith.constant dense<0x7F800000> : vector<57xf32>
      %137 = vector.multi_reduction <minimumf>, %136, %cst_57 [1] : vector<57x57xf32> to vector<57xf32>
      %138 = vector.shape_cast %137 : vector<57xf32> to vector<57x1xf32>
      %cst_58 = arith.constant dense<0x7F800000> : vector<1xf32>
      %139 = vector.multi_reduction <minimumf>, %138, %cst_58 [0] : vector<57x1xf32> to vector<1xf32>
      %140 = vector.shape_cast %139 : vector<1xf32> to vector<1x1xf32>
      %cst_59 = arith.constant dense<0xFF800000> : vector<57xf32>
      %141 = vector.multi_reduction <maximumf>, %136, %cst_59 [1] : vector<57x57xf32> to vector<57xf32>
      %142 = vector.shape_cast %141 : vector<57xf32> to vector<57x1xf32>
      %cst_60 = arith.constant dense<0xFF800000> : vector<1xf32>
      %143 = vector.multi_reduction <maximumf>, %142, %cst_60 [0] : vector<57x1xf32> to vector<1xf32>
      %144 = vector.shape_cast %143 : vector<1xf32> to vector<1x1xf32>
      %145 = arith.subf %144, %140 : vector<1x1xf32>
      %cst_61 = arith.constant 1.000000e+00 : f32
      %146 = vector.broadcast %cst_61 : f32 to vector<1x1xf32>
      %147 = arith.divf %146, %145 : vector<1x1xf32>
      %148 = vector.broadcast %140 : vector<1x1xf32> to vector<57x57xf32>
      %149 = arith.subf %136, %148 : vector<57x57xf32>
      %150 = vector.broadcast %147 : vector<1x1xf32> to vector<57x57xf32>
      %151 = arith.mulf %149, %150 : vector<57x57xf32>
      %152 = vector.shape_cast %151 : vector<57x57xf32> to vector<1x57x57xf32>
      %153 = vector.shape_cast %152 : vector<1x57x57xf32> to vector<1x57x57xf32>
      %154 = vector.broadcast %153 : vector<1x57x57xf32> to vector<3x57x57xf32>
      %155 = arith.index_cast %86 : i32 to index
      %c0_62 = arith.constant 0 : index
      %c0_63 = arith.constant 0 : index
      %c0_64 = arith.constant 0 : index
      %156 = vector.load %arg3[%155, %c0_62, %c0_63, %c0_64] : memref<2x3x57x57xf32, #tpu.memory_space<vmem>>, vector<1x3x57x57xf32>
      %157 = vector.shape_cast %156 : vector<1x3x57x57xf32> to vector<3x57x57xf32>
      %158 = vector.shape_cast %154 : vector<3x57x57xf32> to vector<1x3x57x57xf32>
      tpu.vector_store %arg3[%155, %c0_62, %c0_63, %c0_64], %158 {strides = array<i32>} : memref<2x3x57x57xf32, #tpu.memory_space<vmem>>, vector<1x3x57x57xf32>,
    }
    %c2_i32_27 = arith.constant 2 : i32
    return
  }
}

</mosaic_0001>

<llo_original>
// kernel: _lambda_.1
$region0: #{_lambda_.1}
  #allocation0 [shape = 'u32[]', space=smem, size = 0x4, offset = 0x4, fixed_abs, tag = 'smem constant byte address 0x4 - core index']
  #allocation1 [shape = 'u32[144,128]{1,0:T(1,128)}', space=vmem, size = 0x12000, scoped, tag = 'internal scratch']
  %s0 = inlined_call_operand.vmem [shape: f32[2,8,6,6], index: 0, kind: input, shape index: {}]
  %s1 = inlined_call_operand.vmem [shape: f32[2,6,13,13], index: 1, kind: input, shape index: {}]
  %s2 = inlined_call_operand.vmem [shape: f32[2,4,27,27], index: 2, kind: input, shape index: {}]
  %s3 = inlined_call_operand.vmem [shape: f32[2,3,57,57], index: 3, kind: output, shape index: {}]
  %s4 = sld [smem:[#allocation0]]
  $region29: #{_lambda_.1} parent=0
    _
  %s6 = ssub.s32 1, %s4
  %s7 = scalar_select 0, %s6, %s4
  // Predicated region
  $region2: #{_lambda_.1} parent=0 // pred_check
    _
  $region3: #{_lambda_.1} parent=0 // pred_check_branch
    %9 = sbr.rel (0) target = $region5
  $region4: #{_lambda_.1} parent=0 // pred_region
    _
  $region5: #{_lambda_.1} parent=0 // pred_fallthru
    _
  // Predicated region
  $region6: #{_lambda_.1} parent=0 // pred_check
    _
  $region7: #{_lambda_.1} parent=0 // pred_check_branch
    %11 = sbr.rel (0) target = $region9
  $region8: #{_lambda_.1} parent=0 // pred_region
    _
  $region9: #{_lambda_.1} parent=0 // pred_fallthru
    _
  // Predicated region
  $region10: #{_lambda_.1} parent=0 // pred_check
    _
  $region11: #{_lambda_.1} parent=0 // pred_check_branch
    %13 = sbr.rel (0) target = $region13
  $region12: #{_lambda_.1} parent=0 // pred_region
    _
  $region13: #{_lambda_.1} parent=0 // pred_fallthru
    _
  %v14 = vlaneseq
  %v15 = vshrl.u32 %v14, 7
  %v16 = vadd.s32 %v15, 8
  %v17 = vlaneseq
  %v18 = vand.u32 %v17, 127
  %v19 = vmul.u32 %v18, 2
  %vm20 = vcmp.ge.s32.totalorder %v15, %v19
  %vm21 = vcmp.ge.s32.totalorder %v16, %v19
  %v22 = vadd.s32 %v19, 3
  %vm23 = vcmp.lt.s32.totalorder %v15, %v22
  %vm24 = vcmp.lt.s32.totalorder %v16, %v22
  %vm25 = vmand %vm20, %vm23
  %vm26 = vmand %vm21, %vm24
  %v27 = vsel %vm25, 1.0, 0.0
  %v28 = vsel %vm26, 1.0, 0.0
  %v29 = vmul.u32 %v15, 2
  %vm30 = vcmp.ge.s32.totalorder %v18, %v29
  %v31 = vadd.s32 %v29, 3
  %vm32 = vcmp.lt.s32.totalorder %v18, %v31
  %vm33 = vmand %vm30, %vm32
  %v34 = vsel %vm33, 1.0, 0.0
  %v35 = vadd.s32 %v15, 16
  %v36 = vadd.s32 %v15, 24
  %vm37 = vcmp.ge.s32.totalorder %v35, %v19
  %vm38 = vcmp.ge.s32.totalorder %v36, %v19
  %vm39 = vcmp.lt.s32.totalorder %v35, %v22
  %vm40 = vcmp.lt.s32.totalorder %v36, %v22
  %vm41 = vmand %vm37, %vm39
  %vm42 = vmand %vm38, %vm40
  %v43 = vsel %vm41, 1.0, 0.0
  %v44 = vsel %vm42, 1.0, 0.0
  %v45 = vmul.u32 %v16, 2
  %vm46 = vcmp.ge.s32.totalorder %v18, %v45
  %v47 = vadd.s32 %v45, 3
  %vm48 = vcmp.lt.s32.totalorder %v18, %v47
  %vm49 = vmand %vm46, %vm48
  %v50 = vsel %vm49, 1.0, 0.0
  %v51 = vadd.s32 %v15, 32
  %v52 = vadd.s32 %v15, 40
  %v53 = vadd.s32 %v15, 48
  %v54 = vadd.s32 %v15, 56
  %vm55 = vcmp.ge.s32.totalorder %v51, %v19
  %vm56 = vcmp.ge.s32.totalorder %v52, %v19
  %vm57 = vcmp.ge.s32.totalorder %v53, %v19
  %vm58 = vcmp.ge.s32.totalorder %v54, %v19
  %v59 = vadd.s32 %v19, 5
  %vm60 = vcmp.lt.s32.totalorder %v15, %v59
  %vm61 = vcmp.lt.s32.totalorder %v16, %v59
  %vm62 = vcmp.lt.s32.totalorder %v35, %v59
  %vm63 = vcmp.lt.s32.totalorder %v36, %v59
  %vm64 = vcmp.lt.s32.totalorder %v51, %v59
  %vm65 = vcmp.lt.s32.totalorder %v52, %v59
  %vm66 = vcmp.lt.s32.totalorder %v53, %v59
  %vm67 = vcmp.lt.s32.totalorder %v54, %v59
  %vm68 = vmand %vm20, %vm60
  %vm69 = vmand %vm21, %vm61
  %vm70 = vmand %vm37, %vm62
  %vm71 = vmand %vm38, %vm63
  %vm72 = vmand %vm55, %vm64
  %vm73 = vmand %vm56, %vm65
  %vm74 = vmand %vm57, %vm66
  %vm75 = vmand %vm58, %vm67
  %v76 = vsel %vm68, 1.0, 0.0
  %v77 = vsel %vm69, 1.0, 0.0
  %v78 = vsel %vm70, 1.0, 0.0
  %v79 = vsel %vm71, 1.0, 0.0
  %v80 = vsel %vm72, 1.0, 0.0
  %v81 = vsel %vm73, 1.0, 0.0
  %v82 = vsel %vm74, 1.0, 0.0
  %v83 = vsel %vm75, 1.0, 0.0
  %v84 = vmul.u32 %v35, 2
  %v85 = vmul.u32 %v36, 2
  %vm86 = vcmp.ge.s32.totalorder %v18, %v84
  %vm87 = vcmp.ge.s32.totalorder %v18, %v85
  %v88 = vadd.s32 %v29, 5
  %v89 = vadd.s32 %v45, 5
  %v90 = vadd.s32 %v84, 5
  %v91 = vadd.s32 %v85, 5
  %vm92 = vcmp.lt.s32.totalorder %v18, %v88
  %vm93 = vcmp.lt.s32.totalorder %v18, %v89
  %vm94 = vcmp.lt.s32.totalorder %v18, %v90
  %vm95 = vcmp.lt.s32.totalorder %v18, %v91
  %vm96 = vmand %vm30, %vm92
  %vm97 = vmand %vm46, %vm93
  %vm98 = vmand %vm86, %vm94
  %vm99 = vmand %vm87, %vm95
  %v100 = vsel %vm96, 1.0, 0.0
  %v101 = vsel %vm97, 1.0, 0.0
  %v102 = vsel %vm98, 1.0, 0.0
  %v103 = vsel %vm99, 1.0, 0.0
  loop: start=0, step=1, limit=2
  $region14: #{_lambda_.1} parent=0 // loop_pre_header
    _
  $region15: #{_lambda_.1} parent=0 // loop_header
    %s105 = sphi 0, %s109
    %p106 = scmp.ge.s32.totalorder %s105, 2
  $region16: #{_lambda_.1} parent=0 // loop_header_branch
    %108 = sbr.rel (%p106) target = $region20
  $region17: #{_lambda_.1} parent=0 // loop_body
    %s110 = smul.u32 %s105, 64
    %s111 = scalar_lea.vmem %s0, %s110
    %v112 = vld [vmem:[%s111] sm:$0x3f]
    %v113 = vld [vmem:[%s111 + $0x8] sm:$0x3f]
    %v114 = vld [vmem:[%s111 + $0x10] sm:$0x3f]
    %v115 = vld [vmem:[%s111 + $0x18] sm:$0x3f]
    %v116 = vld [vmem:[%s111 + $0x20] sm:$0x3f]
    %v117 = vld [vmem:[%s111 + $0x28] sm:$0x3f]
    %v118 = vld [vmem:[%s111 + $0x30] sm:$0x3f]
    %v119 = vld [vmem:[%s111 + $0x38] sm:$0x3f]
    %vm120 = vcmask 46080
    %v121 = vsel %vm120, %v112, 0.0
    %v122 = vsel %vm120, %v113, 0.0
    %v123 = vadd.f32 %v121, %v122
    %v124 = vsel %vm120, %v114, 0.0
    %v125 = vadd.f32 %v123, %v124
    %v126 = vsel %vm120, %v115, 0.0
    %v127 = vadd.f32 %v125, %v126
    %v128 = vsel %vm120, %v116, 0.0
    %v129 = vadd.f32 %v127, %v128
    %v130 = vsel %vm120, %v117, 0.0
    %v131 = vadd.f32 %v129, %v130
    %v132 = vsel %vm120, %v118, 0.0
    %v133 = vadd.f32 %v131, %v132
    %v134 = vsel %vm120, %v119, 0.0
    %v135 = vadd.f32 %v133, %v134
    %vm136 = vcmask 48128
    %v138 = vsel %vm136, %v27, 0
    %v141 = vsel %vm136, %v28, 0
    %vm143 = vcmask 1045504
    %v145 = vsel %vm143, %v135, 0
    %147 = vmatprep.subr.mxu0 0.0
    %148 = vmatpush1.msra.mxu0 0.0
    %149 = vmatprep.subr.mxu0 0.0
    %150 = vmatpush1.msra.mxu0 0.0
    %151 = vmatprep.subr.mxu0 0.0
    %152 = vmatpush1.msra.mxu0 0.0
    %153 = vmatprep.subr.mxu0 0.0
    %154 = vmatpush1.msra.mxu0 0.0
    %155 = vmatprep.subr.mxu0 0.0
    %156 = vmatpush1.msra.mxu0 0.0
    %157 = vmatprep.subr.mxu0 0.0
    %158 = vmatpush1.msra.mxu0 0.0
    %159 = vmatprep.subr.mxu0 0.0
    %160 = vmatpush1.msra.mxu0 0.0
    %161 = vmatprep.subr.mxu0 0.0
    %162 = vmatpush1.msra.mxu0 0.0
    %163 = vmatprep.subr.mxu0 0.0
    %164 = vmatpush1.msra.mxu0 0.0
    %165 = vmatprep.subr.mxu0 0.0
    %166 = vmatpush1.msra.mxu0 0.0
    %167 = vmatprep.subr.mxu0 0.0
    %168 = vmatpush1.msra.mxu0 0.0
    %169 = vmatprep.subr.mxu0 0.0
    %170 = vmatpush1.msra.mxu0 0.0
    %171 = vmatprep.subr.mxu0 0.0
    %172 = vmatpush1.msra.mxu0 0.0
    %173 = vmatprep.subr.mxu0 0.0
    %174 = vmatpush1.msra.mxu0 0.0
    %175 = vmatprep.subr.mxu0 0.0
    %176 = vmatpush1.msra.mxu0 0.0
    %177 = vmatprep.subr.mxu0 0.0
    %178 = vmatpush1.msra.mxu0 %v145
    %179 = vmatprep.subr.mxu0 0.0
    %180 = vmatpush2.msra.mxu0 0.0
    %181 = vmatprep.subr.mxu0 0.0
    %182 = vmatpush2.msra.mxu0 0.0
    %183 = vmatprep.subr.mxu0 0.0
    %184 = vmatpush2.msra.mxu0 0.0
    %185 = vmatprep.subr.mxu0 0.0
    %186 = vmatpush2.msra.mxu0 0.0
    %187 = vmatprep.subr.mxu0 0.0
    %188 = vmatpush2.msra.mxu0 0.0
    %189 = vmatprep.subr.mxu0 0.0
    %190 = vmatpush2.msra.mxu0 0.0
    %191 = vmatprep.subr.mxu0 0.0
    %192 = vmatpush2.msra.mxu0 0.0
    %193 = vmatprep.subr.mxu0 0.0
    %194 = vmatpush2.msra.mxu0 0.0
    %195 = vmatprep.subr.mxu0 0.0
    %196 = vmatpush2.msra.mxu0 0.0
    %197 = vmatprep.subr.mxu0 0.0
    %198 = vmatpush2.msra.mxu0 0.0
    %199 = vmatprep.subr.mxu0 0.0
    %200 = vmatpush2.msra.mxu0 0.0
    %201 = vmatprep.subr.mxu0 0.0
    %202 = vmatpush2.msra.mxu0 0.0
    %203 = vmatprep.subr.mxu0 0.0
    %204 = vmatpush2.msra.mxu0 0.0
    %205 = vmatprep.subr.mxu0 0.0
    %206 = vmatpush2.msra.mxu0 0.0
    %207 = vmatprep.subr.mxu0 0.0
    %208 = vmatpush2.msra.mxu0 0.0
    %209 = vmatprep.subr.mxu0 0.0
    %210 = vmatpush2.msra.mxu0 0.0
    %211 = vmatprep.mubr.f32.mxu0 0.0
    %212 = vmatmul.mubr.f32.gmra.mxu0 %v138
    %v213 = vpop.f32.mrf.mxu0
    %v214 = vadd.f32 0.0, %v213
    %v215 = vpop.f32.mrf.mxu0
    %216 = vmatprep.mubr.f32.mxu0 0.0
    %217 = vmatmul.mubr.f32.gmra.mxu0 %v141
    %v218 = vpop.f32.mrf.mxu0
    %v219 = vadd.f32 0.0, %v218
    %v220 = vpop.f32.mrf.mxu0
    %221 = vdwg.mxu0
    %v223 = vsel %vm136, %v214, 0
    %v226 = vsel %vm136, %v219, 0
    %v229 = vsel %vm143, %v34, 0
    %231 = vmatprep.subr.mxu0 0.0
    %232 = vmatpush1.msra.mxu0 0.0
    %233 = vmatprep.subr.mxu0 0.0
    %234 = vmatpush1.msra.mxu0 0.0
    %235 = vmatprep.subr.mxu0 0.0
    %236 = vmatpush1.msra.mxu0 0.0
    %237 = vmatprep.subr.mxu0 0.0
    %238 = vmatpush1.msra.mxu0 0.0
    %239 = vmatprep.subr.mxu0 0.0
    %240 = vmatpush1.msra.mxu0 0.0
    %241 = vmatprep.subr.mxu0 0.0
    %242 = vmatpush1.msra.mxu0 0.0
    %243 = vmatprep.subr.mxu0 0.0
    %244 = vmatpush1.msra.mxu0 0.0
    %245 = vmatprep.subr.mxu0 0.0
    %246 = vmatpush1.msra.mxu0 0.0
    %247 = vmatprep.subr.mxu0 0.0
    %248 = vmatpush1.msra.mxu0 0.0
    %249 = vmatprep.subr.mxu0 0.0
    %250 = vmatpush1.msra.mxu0 0.0
    %251 = vmatprep.subr.mxu0 0.0
    %252 = vmatpush1.msra.mxu0 0.0
    %253 = vmatprep.subr.mxu0 0.0
    %254 = vmatpush1.msra.mxu0 0.0
    %255 = vmatprep.subr.mxu0 0.0
    %256 = vmatpush1.msra.mxu0 0.0
    %257 = vmatprep.subr.mxu0 0.0
    %258 = vmatpush1.msra.mxu0 0.0
    %259 = vmatprep.subr.mxu0 0.0
    %260 = vmatpush1.msra.mxu0 0.0
    %261 = vmatprep.subr.mxu0 0.0
    %262 = vmatpush1.msra.mxu0 %v229
    %263 = vmatprep.subr.mxu0 0.0
    %264 = vmatpush2.msra.mxu0 0.0
    %265 = vmatprep.subr.mxu0 0.0
    %266 = vmatpush2.msra.mxu0 0.0
    %267 = vmatprep.subr.mxu0 0.0
    %268 = vmatpush2.msra.mxu0 0.0
    %269 = vmatprep.subr.mxu0 0.0
    %270 = vmatpush2.msra.mxu0 0.0
    %271 = vmatprep.subr.mxu0 0.0
    %272 = vmatpush2.msra.mxu0 0.0
    %273 = vmatprep.subr.mxu0 0.0
    %274 = vmatpush2.msra.mxu0 0.0
    %275 = vmatprep.subr.mxu0 0.0
    %276 = vmatpush2.msra.mxu0 0.0
    %277 = vmatprep.subr.mxu0 0.0
    %278 = vmatpush2.msra.mxu0 0.0
    %279 = vmatprep.subr.mxu0 0.0
    %280 = vmatpush2.msra.mxu0 0.0
    %281 = vmatprep.subr.mxu0 0.0
    %282 = vmatpush2.msra.mxu0 0.0
    %283 = vmatprep.subr.mxu0 0.0
    %284 = vmatpush2.msra.mxu0 0.0
    %285 = vmatprep.subr.mxu0 0.0
    %286 = vmatpush2.msra.mxu0 0.0
    %287 = vmatprep.subr.mxu0 0.0
    %288 = vmatpush2.msra.mxu0 0.0
    %289 = vmatprep.subr.mxu0 0.0
    %290 = vmatpush2.msra.mxu0 0.0
    %291 = vmatprep.subr.mxu0 0.0
    %292 = vmatpush2.msra.mxu0 0.0
    %293 = vmatprep.subr.mxu0 0.0
    %294 = vmatpush2.msra.mxu0 0.0
    %295 = vmatprep.mubr.f32.mxu0 0.0
    %296 = vmatmul.mubr.f32.gmra.mxu0 %v223
    %v297 = vpop.f32.mrf.mxu0
    %v298 = vadd.f32 0.0, %v297
    %v299 = vpop.f32.mrf.mxu0
    %300 = vmatprep.mubr.f32.mxu0 0.0
    %301 = vmatmul.mubr.f32.gmra.mxu0 %v226
    %v302 = vpop.f32.mrf.mxu0
    %v303 = vadd.f32 0.0, %v302
    %v304 = vpop.f32.mrf.mxu0
    %305 = vdwg.mxu0
    %vm306 = vcmask 105472
    %v307 = vsel %vm306, %v298, inf
    %308 = vmin.xlane.f32.xlu0 %v307
    %v309 = vpop.xlane.xlu0 %308
    %vm310 = vcmask 102400
    %v311 = vsel %vm310, %v303, inf
    %312 = vmin.xlane.f32.xlu0 %v311
    %v313 = vpop.xlane.xlu0 %312
    %vm314 = vcmask 1044480
    %v315 = vsel %vm314, %v313, inf
    %v316 = vmin.f32 %v309, %v315
    %v317 = vrot.slane %v316, 4
    %v318 = vmin.f32 %v316, %v317
    %v319 = vrot.slane %v318, 2
    %v320 = vmin.f32 %v318, %v319
    %v321 = vrot.slane %v320, 1
    %v322 = vmin.f32 %v320, %v321
    %v323 = vsel %vm306, %v298, -inf
    %324 = vmax.xlane.f32.xlu0 %v323
    %v325 = vpop.xlane.xlu0 %324
    %v326 = vsel %vm310, %v303, -inf
    %327 = vmax.xlane.f32.xlu0 %v326
    %v328 = vpop.xlane.xlu0 %327
    %v329 = vsel %vm314, %v328, -inf
    %v330 = vmax.f32 %v325, %v329
    %v331 = vrot.slane %v330, 4
    %v332 = vmax.f32 %v330, %v331
    %v333 = vrot.slane %v332, 2
    %v334 = vmax.f32 %v332, %v333
    %v335 = vrot.slane %v334, 1
    %v336 = vmax.f32 %v334, %v335
    %v337 = vsub.f32 %v336, %v322
    %v338 = vrcp.pop %v337
    %v339 = vmul.f32 1.0, %v338
    %v340 = vsub.f32 %v298, %v322
    %v341 = vsub.f32 %v303, %v322
    %v342 = vmul.f32 %v340, %v339
    %v343 = vmul.f32 %v341, %v339
    %s344 = smul.u32 %s105, 96
    %s345 = scalar_lea.vmem %s1, %s344
    %v346 = vld [vmem:[%s345] sm:$0xff]
    %v347 = vld [vmem:[%s345 + $0x8] sm:$0x1f]
    %v348 = vld [vmem:[%s345 + $0x10] sm:$0xff]
    %v349 = vld [vmem:[%s345 + $0x18] sm:$0x1f]
    %v350 = vld [vmem:[%s345 + $0x20] sm:$0xff]
    %v351 = vld [vmem:[%s345 + $0x28] sm:$0x1f]
    %v352 = vld [vmem:[%s345 + $0x30] sm:$0xff]
    %v353 = vld [vmem:[%s345 + $0x38] sm:$0x1f]
    %v354 = vld [vmem:[%s345 + $0x40] sm:$0xff]
    %v355 = vld [vmem:[%s345 + $0x48] sm:$0x1f]
    %v356 = vld [vmem:[%s345 + $0x50] sm:$0xff]
    %v357 = vld [vmem:[%s345 + $0x58] sm:$0x1f]
    %v358 = vsel %vm306, %v346, 0.0
    %v359 = vsel %vm306, %v348, 0.0
    %v360 = vadd.f32 %v358, %v359
    %v361 = vsel %vm306, %v350, 0.0
    %v362 = vadd.f32 %v360, %v361
    %v363 = vsel %vm306, %v352, 0.0
    %v364 = vadd.f32 %v362, %v363
    %v365 = vsel %vm306, %v354, 0.0
    %v366 = vadd.f32 %v364, %v365
    %v367 = vsel %vm306, %v356, 0.0
    %v368 = vadd.f32 %v366, %v367
    %v369 = vsel %vm310, %v347, 0.0
    %v370 = vsel %vm310, %v349, 0.0
    %v371 = vadd.f32 %v369, %v370
    %v372 = vsel %vm310, %v351, 0.0
    %v373 = vadd.f32 %v371, %v372
    %v374 = vsel %vm310, %v353, 0.0
    %v375 = vadd.f32 %v373, %v374
    %v376 = vsel %vm310, %v355, 0.0
    %v377 = vadd.f32 %v375, %v376
    %v378 = vsel %vm310, %v357, 0.0
    %v379 = vadd.f32 %v377, %v378
    %v380 = vmul.f32 %v342, %v368
    %v381 = vmul.f32 %v343, %v379
    %v382 = vsel %vm306, %v27, 0
    %v384 = vsel %vm306, %v28, 0
    %v387 = vsel %vm306, %v43, 0
    %v390 = vsel %vm306, %v44, 0
    %v393 = vsel %vm314, %v381, 0
    %395 = vmatprep.subr.mxu0 0.0
    %396 = vmatpush1.msra.mxu0 0.0
    %397 = vmatprep.subr.mxu0 0.0
    %398 = vmatpush1.msra.mxu0 0.0
    %399 = vmatprep.subr.mxu0 0.0
    %400 = vmatpush1.msra.mxu0 0.0
    %401 = vmatprep.subr.mxu0 0.0
    %402 = vmatpush1.msra.mxu0 0.0
    %403 = vmatprep.subr.mxu0 0.0
    %404 = vmatpush1.msra.mxu0 0.0
    %405 = vmatprep.subr.mxu0 0.0
    %406 = vmatpush1.msra.mxu0 0.0
    %407 = vmatprep.subr.mxu0 0.0
    %408 = vmatpush1.msra.mxu0 0.0
    %409 = vmatprep.subr.mxu0 0.0
    %410 = vmatpush1.msra.mxu0 0.0
    %411 = vmatprep.subr.mxu0 0.0
    %412 = vmatpush1.msra.mxu0 0.0
    %413 = vmatprep.subr.mxu0 0.0
    %414 = vmatpush1.msra.mxu0 0.0
    %415 = vmatprep.subr.mxu0 0.0
    %416 = vmatpush1.msra.mxu0 0.0
    %417 = vmatprep.subr.mxu0 0.0
    %418 = vmatpush1.msra.mxu0 0.0
    %419 = vmatprep.subr.mxu0 0.0
    %420 = vmatpush1.msra.mxu0 0.0
    %421 = vmatprep.subr.mxu0 0.0
    %422 = vmatpush1.msra.mxu0 0.0
    %423 = vmatprep.subr.mxu0 0.0
    %424 = vmatpush1.msra.mxu0 %v393
    %425 = vmatprep.subr.mxu0 0.0
    %426 = vmatpush1.msra.mxu0 %v380
    %427 = vmatprep.subr.mxu0 0.0
    %428 = vmatpush2.msra.mxu0 0.0
    %429 = vmatprep.subr.mxu0 0.0
    %430 = vmatpush2.msra.mxu0 0.0
    %431 = vmatprep.subr.mxu0 0.0
    %432 = vmatpush2.msra.mxu0 0.0
    %433 = vmatprep.subr.mxu0 0.0
    %434 = vmatpush2.msra.mxu0 0.0
    %435 = vmatprep.subr.mxu0 0.0
    %436 = vmatpush2.msra.mxu0 0.0
    %437 = vmatprep.subr.mxu0 0.0
    %438 = vmatpush2.msra.mxu0 0.0
    %439 = vmatprep.subr.mxu0 0.0
    %440 = vmatpush2.msra.mxu0 0.0
    %441 = vmatprep.subr.mxu0 0.0
    %442 = vmatpush2.msra.mxu0 0.0
    %443 = vmatprep.subr.mxu0 0.0
    %444 = vmatpush2.msra.mxu0 0.0
    %445 = vmatprep.subr.mxu0 0.0
    %446 = vmatpush2.msra.mxu0 0.0
    %447 = vmatprep.subr.mxu0 0.0
    %448 = vmatpush2.msra.mxu0 0.0
    %449 = vmatprep.subr.mxu0 0.0
    %450 = vmatpush2.msra.mxu0 0.0
    %451 = vmatprep.subr.mxu0 0.0
    %452 = vmatpush2.msra.mxu0 0.0
    %453 = vmatprep.subr.mxu0 0.0
    %454 = vmatpush2.msra.mxu0 0.0
    %455 = vmatprep.subr.mxu0 0.0
    %456 = vmatpush2.msra.mxu0 0.0
    %457 = vmatprep.subr.mxu0 0.0
    %458 = vmatpush2.msra.mxu0 0.0
    %459 = vmatprep.mubr.f32.mxu0 0.0
    %460 = vmatmul.mubr.f32.gmra.mxu0 %v382
    %v461 = vpop.f32.mrf.mxu0
    %v462 = vadd.f32 0.0, %v461
    %v463 = vpop.f32.mrf.mxu0
    %464 = vmatprep.mubr.f32.mxu0 0.0
    %465 = vmatmul.mubr.f32.gmra.mxu0 %v384
    %v466 = vpop.f32.mrf.mxu0
    %v467 = vadd.f32 0.0, %v466
    %v468 = vpop.f32.mrf.mxu0
    %469 = vmatprep.mubr.f32.mxu0 0.0
    %470 = vmatmul.mubr.f32.gmra.mxu0 %v387
    %v471 = vpop.f32.mrf.mxu0
    %v472 = vadd.f32 0.0, %v471
    %v473 = vpop.f32.mrf.mxu0
    %474 = vmatprep.mubr.f32.mxu0 0.0
    %475 = vmatmul.mubr.f32.gmra.mxu0 %v390
    %v476 = vpop.f32.mrf.mxu0
    %v477 = vadd.f32 0.0, %v476
    %v478 = vpop.f32.mrf.mxu0
    %479 = vdwg.mxu0
    %v481 = vsel %vm306, %v462, 0
    %v484 = vsel %vm306, %v467, 0
    %v487 = vsel %vm306, %v472, 0
    %v490 = vsel %vm306, %v477, 0
    %v493 = vsel %vm314, %v50, 0
    %495 = vmatprep.subr.mxu0 0.0
    %496 = vmatpush1.msra.mxu0 0.0
    %497 = vmatprep.subr.mxu0 0.0
    %498 = vmatpush1.msra.mxu0 0.0
    %499 = vmatprep.subr.mxu0 0.0
    %500 = vmatpush1.msra.mxu0 0.0
    %501 = vmatprep.subr.mxu0 0.0
    %502 = vmatpush1.msra.mxu0 0.0
    %503 = vmatprep.subr.mxu0 0.0
    %504 = vmatpush1.msra.mxu0 0.0
    %505 = vmatprep.subr.mxu0 0.0
    %506 = vmatpush1.msra.mxu0 0.0
    %507 = vmatprep.subr.mxu0 0.0
    %508 = vmatpush1.msra.mxu0 0.0
    %509 = vmatprep.subr.mxu0 0.0
    %510 = vmatpush1.msra.mxu0 0.0
    %511 = vmatprep.subr.mxu0 0.0
    %512 = vmatpush1.msra.mxu0 0.0
    %513 = vmatprep.subr.mxu0 0.0
    %514 = vmatpush1.msra.mxu0 0.0
    %515 = vmatprep.subr.mxu0 0.0
    %516 = vmatpush1.msra.mxu0 0.0
    %517 = vmatprep.subr.mxu0 0.0
    %518 = vmatpush1.msra.mxu0 0.0
    %519 = vmatprep.subr.mxu0 0.0
    %520 = vmatpush1.msra.mxu0 0.0
    %521 = vmatprep.subr.mxu0 0.0
    %522 = vmatpush1.msra.mxu0 0.0
    %523 = vmatprep.subr.mxu0 0.0
    %524 = vmatpush1.msra.mxu0 %v493
    %525 = vmatprep.subr.mxu0 0.0
    %526 = vmatpush1.msra.mxu0 %v34
    %527 = vmatprep.subr.mxu0 0.0
    %528 = vmatpush2.msra.mxu0 0.0
    %529 = vmatprep.subr.mxu0 0.0
    %530 = vmatpush2.msra.mxu0 0.0
    %531 = vmatprep.subr.mxu0 0.0
    %532 = vmatpush2.msra.mxu0 0.0
    %533 = vmatprep.subr.mxu0 0.0
    %534 = vmatpush2.msra.mxu0 0.0
    %535 = vmatprep.subr.mxu0 0.0
    %536 = vmatpush2.msra.mxu0 0.0
    %537 = vmatprep.subr.mxu0 0.0
    %538 = vmatpush2.msra.mxu0 0.0
    %539 = vmatprep.subr.mxu0 0.0
    %540 = vmatpush2.msra.mxu0 0.0
    %541 = vmatprep.subr.mxu0 0.0
    %542 = vmatpush2.msra.mxu0 0.0
    %543 = vmatprep.subr.mxu0 0.0
    %544 = vmatpush2.msra.mxu0 0.0
    %545 = vmatprep.subr.mxu0 0.0
    %546 = vmatpush2.msra.mxu0 0.0
    %547 = vmatprep.subr.mxu0 0.0
    %548 = vmatpush2.msra.mxu0 0.0
    %549 = vmatprep.subr.mxu0 0.0
    %550 = vmatpush2.msra.mxu0 0.0
    %551 = vmatprep.subr.mxu0 0.0
    %552 = vmatpush2.msra.mxu0 0.0
    %553 = vmatprep.subr.mxu0 0.0
    %554 = vmatpush2.msra.mxu0 0.0
    %555 = vmatprep.subr.mxu0 0.0
    %556 = vmatpush2.msra.mxu0 0.0
    %557 = vmatprep.subr.mxu0 0.0
    %558 = vmatpush2.msra.mxu0 0.0
    %559 = vmatprep.mubr.f32.mxu0 0.0
    %560 = vmatmul.mubr.f32.gmra.mxu0 %v481
    %v561 = vpop.f32.mrf.mxu0
    %v562 = vadd.f32 0.0, %v561
    %v563 = vpop.f32.mrf.mxu0
    %564 = vmatprep.mubr.f32.mxu0 0.0
    %565 = vmatmul.mubr.f32.gmra.mxu0 %v484
    %v566 = vpop.f32.mrf.mxu0
    %v567 = vadd.f32 0.0, %v566
    %v568 = vpop.f32.mrf.mxu0
    %569 = vmatprep.mubr.f32.mxu0 0.0
    %570 = vmatmul.mubr.f32.gmra.mxu0 %v487
    %v571 = vpop.f32.mrf.mxu0
    %v572 = vadd.f32 0.0, %v571
    %v573 = vpop.f32.mrf.mxu0
    %574 = vmatprep.mubr.f32.mxu0 0.0
    %575 = vmatmul.mubr.f32.gmra.mxu0 %v490
    %v576 = vpop.f32.mrf.mxu0
    %v577 = vadd.f32 0.0, %v576
    %v578 = vpop.f32.mrf.mxu0
    %579 = vdwg.mxu0
    %vm580 = vcmask 220160
    %v581 = vsel %vm580, %v562, inf
    %582 = vmin.xlane.f32.xlu0 %v581
    %v583 = vpop.xlane.xlu0 %582
    %v584 = vsel %vm580, %v567, inf
    %585 = vmin.xlane.f32.xlu0 %v584
    %v586 = vpop.xlane.xlu0 %585
    %v587 = vsel %vm580, %v572, inf
    %588 = vmin.xlane.f32.xlu0 %v587
    %v589 = vpop.xlane.xlu0 %588
    %vm590 = vcmask 215040
    %v591 = vsel %vm590, %v577, inf
    %592 = vmin.xlane.f32.xlu0 %v591
    %v593 = vpop.xlane.xlu0 %592
    %vm594 = vcmask 1042432
    %v595 = vsel %vm594, %v593, inf
    %v596 = vmin.f32 %v583, %v586
    %v597 = vmin.f32 %v589, %v595
    %v598 = vmin.f32 %v596, %v597
    %v599 = vrot.slane %v598, 4
    %v600 = vmin.f32 %v598, %v599
    %v601 = vrot.slane %v600, 2
    %v602 = vmin.f32 %v600, %v601
    %v603 = vrot.slane %v602, 1
    %v604 = vmin.f32 %v602, %v603
    %v605 = vsel %vm580, %v562, -inf
    %606 = vmax.xlane.f32.xlu0 %v605
    %v607 = vpop.xlane.xlu0 %606
    %v608 = vsel %vm580, %v567, -inf
    %609 = vmax.xlane.f32.xlu0 %v608
    %v610 = vpop.xlane.xlu0 %609
    %v611 = vsel %vm580, %v572, -inf
    %612 = vmax.xlane.f32.xlu0 %v611
    %v613 = vpop.xlane.xlu0 %612
    %v614 = vsel %vm590, %v577, -inf
    %615 = vmax.xlane.f32.xlu0 %v614
    %v616 = vpop.xlane.xlu0 %615
    %v617 = vsel %vm594, %v616, -inf
    %v618 = vmax.f32 %v607, %v610
    %v619 = vmax.f32 %v613, %v617
    %v620 = vmax.f32 %v618, %v619
    %v621 = vrot.slane %v620, 4
    %v622 = vmax.f32 %v620, %v621
    %v623 = vrot.slane %v622, 2
    %v624 = vmax.f32 %v622, %v623
    %v625 = vrot.slane %v624, 1
    %v626 = vmax.f32 %v624, %v625
    %v627 = vsub.f32 %v626, %v604
    %v628 = vrcp.pop %v627
    %v629 = vmul.f32 1.0, %v628
    %v630 = vsub.f32 %v562, %v604
    %v631 = vsub.f32 %v567, %v604
    %v632 = vsub.f32 %v572, %v604
    %v633 = vsub.f32 %v577, %v604
    %v634 = vmul.f32 %v630, %v629
    %v635 = vmul.f32 %v631, %v629
    %v636 = vmul.f32 %v632, %v629
    %v637 = vmul.f32 %v633, %v629
    %s638 = smul.u32 %s105, 128
    %s639 = scalar_lea.vmem %s2, %s638
    %v640 = vld [vmem:[%s639] sm:$0xff]
    %v641 = vld [vmem:[%s639 + $0x8] sm:$0xff]
    %v642 = vld [vmem:[%s639 + $0x10] sm:$0xff]
    %v643 = vld [vmem:[%s639 + $0x18] sm:$0x7]
    %v644 = vld [vmem:[%s639 + $0x20] sm:$0xff]
    %v645 = vld [vmem:[%s639 + $0x28] sm:$0xff]
    %v646 = vld [vmem:[%s639 + $0x30] sm:$0xff]
    %v647 = vld [vmem:[%s639 + $0x38] sm:$0x7]
    %v648 = vld [vmem:[%s639 + $0x40] sm:$0xff]
    %v649 = vld [vmem:[%s639 + $0x48] sm:$0xff]
    %v650 = vld [vmem:[%s639 + $0x50] sm:$0xff]
    %v651 = vld [vmem:[%s639 + $0x58] sm:$0x7]
    %v652 = vld [vmem:[%s639 + $0x60] sm:$0xff]
    %v653 = vld [vmem:[%s639 + $0x68] sm:$0xff]
    %v654 = vld [vmem:[%s639 + $0x70] sm:$0xff]
    %v655 = vld [vmem:[%s639 + $0x78] sm:$0x7]
    %v656 = vsel %vm580, %v640, 0.0
    %v657 = vsel %vm580, %v644, 0.0
    %v658 = vadd.f32 %v656, %v657
    %v659 = vsel %vm580, %v648, 0.0
    %v660 = vadd.f32 %v658, %v659
    %v661 = vsel %vm580, %v652, 0.0
    %v662 = vadd.f32 %v660, %v661
    %v663 = vsel %vm580, %v641, 0.0
    %v664 = vsel %vm580, %v645, 0.0
    %v665 = vadd.f32 %v663, %v664
    %v666 = vsel %vm580, %v649, 0.0
    %v667 = vadd.f32 %v665, %v666
    %v668 = vsel %vm580, %v653, 0.0
    %v669 = vadd.f32 %v667, %v668
    %v670 = vsel %vm580, %v642, 0.0
    %v671 = vsel %vm580, %v646, 0.0
    %v672 = vadd.f32 %v670, %v671
    %v673 = vsel %vm580, %v650, 0.0
    %v674 = vadd.f32 %v672, %v673
    %v675 = vsel %vm580, %v654, 0.0
    %v676 = vadd.f32 %v674, %v675
    %v677 = vsel %vm590, %v643, 0.0
    %v678 = vsel %vm590, %v647, 0.0
    %v679 = vadd.f32 %v677, %v678
    %v680 = vsel %vm590, %v651, 0.0
    %v681 = vadd.f32 %v679, %v680
    %v682 = vsel %vm590, %v655, 0.0
    %v683 = vadd.f32 %v681, %v682
    %v684 = vmul.f32 %v634, %v662
    %v685 = vmul.f32 %v635, %v669
    %v686 = vmul.f32 %v636, %v676
    %v687 = vmul.f32 %v637, %v683
    %v689 = vsel %vm580, %v76, 0
    %v692 = vsel %vm580, %v77, 0
    %v695 = vsel %vm580, %v78, 0
    %v698 = vsel %vm580, %v79, 0
    %v701 = vsel %vm580, %v80, 0
    %v704 = vsel %vm580, %v81, 0
    %v707 = vsel %vm580, %v82, 0
    %v710 = vsel %vm580, %v83, 0
    %v713 = vsel %vm594, %v687, 0
    %715 = vmatprep.subr.mxu0 0.0
    %716 = vmatpush1.msra.mxu0 0.0
    %717 = vmatprep.subr.mxu0 0.0
    %718 = vmatpush1.msra.mxu0 0.0
    %719 = vmatprep.subr.mxu0 0.0
    %720 = vmatpush1.msra.mxu0 0.0
    %721 = vmatprep.subr.mxu0 0.0
    %722 = vmatpush1.msra.mxu0 0.0
    %723 = vmatprep.subr.mxu0 0.0
    %724 = vmatpush1.msra.mxu0 0.0
    %725 = vmatprep.subr.mxu0 0.0
    %726 = vmatpush1.msra.mxu0 0.0
    %727 = vmatprep.subr.mxu0 0.0
    %728 = vmatpush1.msra.mxu0 0.0
    %729 = vmatprep.subr.mxu0 0.0
    %730 = vmatpush1.msra.mxu0 0.0
    %731 = vmatprep.subr.mxu0 0.0
    %732 = vmatpush1.msra.mxu0 0.0
    %733 = vmatprep.subr.mxu0 0.0
    %734 = vmatpush1.msra.mxu0 0.0
    %735 = vmatprep.subr.mxu0 0.0
    %736 = vmatpush1.msra.mxu0 0.0
    %737 = vmatprep.subr.mxu0 0.0
    %738 = vmatpush1.msra.mxu0 0.0
    %739 = vmatprep.subr.mxu0 0.0
    %740 = vmatpush1.msra.mxu0 %v713
    %741 = vmatprep.subr.mxu0 0.0
    %742 = vmatpush1.msra.mxu0 %v686
    %743 = vmatprep.subr.mxu0 0.0
    %744 = vmatpush1.msra.mxu0 %v685
    %745 = vmatprep.subr.mxu0 0.0
    %746 = vmatpush1.msra.mxu0 %v684
    %747 = vmatprep.subr.mxu0 0.0
    %748 = vmatpush2.msra.mxu0 0.0
    %749 = vmatprep.subr.mxu0 0.0
    %750 = vmatpush2.msra.mxu0 0.0
    %751 = vmatprep.subr.mxu0 0.0
    %752 = vmatpush2.msra.mxu0 0.0
    %753 = vmatprep.subr.mxu0 0.0
    %754 = vmatpush2.msra.mxu0 0.0
    %755 = vmatprep.subr.mxu0 0.0
    %756 = vmatpush2.msra.mxu0 0.0
    %757 = vmatprep.subr.mxu0 0.0
    %758 = vmatpush2.msra.mxu0 0.0
    %759 = vmatprep.subr.mxu0 0.0
    %760 = vmatpush2.msra.mxu0 0.0
    %761 = vmatprep.subr.mxu0 0.0
    %762 = vmatpush2.msra.mxu0 0.0
    %763 = vmatprep.subr.mxu0 0.0
    %764 = vmatpush2.msra.mxu0 0.0
    %765 = vmatprep.subr.mxu0 0.0
    %766 = vmatpush2.msra.mxu0 0.0
    %767 = vmatprep.subr.mxu0 0.0
    %768 = vmatpush2.msra.mxu0 0.0
    %769 = vmatprep.subr.mxu0 0.0
    %770 = vmatpush2.msra.mxu0 0.0
    %771 = vmatprep.subr.mxu0 0.0
    %772 = vmatpush2.msra.mxu0 0.0
    %773 = vmatprep.subr.mxu0 0.0
    %774 = vmatpush2.msra.mxu0 0.0
    %775 = vmatprep.subr.mxu0 0.0
    %776 = vmatpush2.msra.mxu0 0.0
    %777 = vmatprep.subr.mxu0 0.0
    %778 = vmatpush2.msra.mxu0 0.0
    %779 = vmatprep.mubr.f32.mxu0 0.0
    %780 = vmatmul.mubr.f32.gmra.mxu0 %v689
    %v781 = vpop.f32.mrf.mxu0
    %v782 = vadd.f32 0.0, %v781
    %v783 = vpop.f32.mrf.mxu0
    %784 = vmatprep.mubr.f32.mxu0 0.0
    %785 = vmatmul.mubr.f32.gmra.mxu0 %v692
    %v786 = vpop.f32.mrf.mxu0
    %v787 = vadd.f32 0.0, %v786
    %v788 = vpop.f32.mrf.mxu0
    %789 = vmatprep.mubr.f32.mxu0 0.0
    %790 = vmatmul.mubr.f32.gmra.mxu0 %v695
    %v791 = vpop.f32.mrf.mxu0
    %v792 = vadd.f32 0.0, %v791
    %v793 = vpop.f32.mrf.mxu0
    %794 = vmatprep.mubr.f32.mxu0 0.0
    %795 = vmatmul.mubr.f32.gmra.mxu0 %v698
    %v796 = vpop.f32.mrf.mxu0
    %v797 = vadd.f32 0.0, %v796
    %v798 = vpop.f32.mrf.mxu0
    %799 = vmatprep.mubr.f32.mxu0 0.0
    %800 = vmatmul.mubr.f32.gmra.mxu0 %v701
    %v801 = vpop.f32.mrf.mxu0
    %v802 = vadd.f32 0.0, %v801
    %v803 = vpop.f32.mrf.mxu0
    %804 = vmatprep.mubr.f32.mxu0 0.0
    %805 = vmatmul.mubr.f32.gmra.mxu0 %v704
    %v806 = vpop.f32.mrf.mxu0
    %v807 = vadd.f32 0.0, %v806
    %v808 = vpop.f32.mrf.mxu0
    %809 = vmatprep.mubr.f32.mxu0 0.0
    %810 = vmatmul.mubr.f32.gmra.mxu0 %v707
    %v811 = vpop.f32.mrf.mxu0
    %v812 = vadd.f32 0.0, %v811
    %v813 = vpop.f32.mrf.mxu0
    %814 = vmatprep.mubr.f32.mxu0 0.0
    %815 = vmatmul.mubr.f32.gmra.mxu0 %v710
    %v816 = vpop.f32.mrf.mxu0
    %v817 = vadd.f32 0.0, %v816
    %v818 = vpop.f32.mrf.mxu0
    %819 = vdwg.mxu0
    %v821 = vsel %vm580, %v782, 0
    %v824 = vsel %vm580, %v787, 0
    %v827 = vsel %vm580, %v792, 0
    %v830 = vsel %vm580, %v797, 0
    %v833 = vsel %vm580, %v802, 0
    %v836 = vsel %vm580, %v807, 0
    %v839 = vsel %vm580, %v812, 0
    %v842 = vsel %vm580, %v817, 0
    %v845 = vsel %vm594, %v103, 0
    %847 = vmatprep.subr.mxu0 0.0
    %848 = vmatpush1.msra.mxu0 0.0
    %849 = vmatprep.subr.mxu0 0.0
    %850 = vmatpush1.msra.mxu0 0.0
    %851 = vmatprep.subr.mxu0 0.0
    %852 = vmatpush1.msra.mxu0 0.0
    %853 = vmatprep.subr.mxu0 0.0
    %854 = vmatpush1.msra.mxu0 0.0
    %855 = vmatprep.subr.mxu0 0.0
    %856 = vmatpush1.msra.mxu0 0.0
    %857 = vmatprep.subr.mxu0 0.0
    %858 = vmatpush1.msra.mxu0 0.0
    %859 = vmatprep.subr.mxu0 0.0
    %860 = vmatpush1.msra.mxu0 0.0
    %861 = vmatprep.subr.mxu0 0.0
    %862 = vmatpush1.msra.mxu0 0.0
    %863 = vmatprep.subr.mxu0 0.0
    %864 = vmatpush1.msra.mxu0 0.0
    %865 = vmatprep.subr.mxu0 0.0
    %866 = vmatpush1.msra.mxu0 0.0
    %867 = vmatprep.subr.mxu0 0.0
    %868 = vmatpush1.msra.mxu0 0.0
    %869 = vmatprep.subr.mxu0 0.0
    %870 = vmatpush1.msra.mxu0 0.0
    %871 = vmatprep.subr.mxu0 0.0
    %872 = vmatpush1.msra.mxu0 %v845
    %873 = vmatprep.subr.mxu0 0.0
    %874 = vmatpush1.msra.mxu0 %v102
    %875 = vmatprep.subr.mxu0 0.0
    %876 = vmatpush1.msra.mxu0 %v101
    %877 = vmatprep.subr.mxu0 0.0
    %878 = vmatpush1.msra.mxu0 %v100
    %879 = vmatprep.subr.mxu0 0.0
    %880 = vmatpush2.msra.mxu0 0.0
    %881 = vmatprep.subr.mxu0 0.0
    %882 = vmatpush2.msra.mxu0 0.0
    %883 = vmatprep.subr.mxu0 0.0
    %884 = vmatpush2.msra.mxu0 0.0
    %885 = vmatprep.subr.mxu0 0.0
    %886 = vmatpush2.msra.mxu0 0.0
    %887 = vmatprep.subr.mxu0 0.0
    %888 = vmatpush2.msra.mxu0 0.0
    %889 = vmatprep.subr.mxu0 0.0
    %890 = vmatpush2.msra.mxu0 0.0
    %891 = vmatprep.subr.mxu0 0.0
    %892 = vmatpush2.msra.mxu0 0.0
    %893 = vmatprep.subr.mxu0 0.0
    %894 = vmatpush2.msra.mxu0 0.0
    %895 = vmatprep.subr.mxu0 0.0
    %896 = vmatpush2.msra.mxu0 0.0
    %897 = vmatprep.subr.mxu0 0.0
    %898 = vmatpush2.msra.mxu0 0.0
    %899 = vmatprep.subr.mxu0 0.0
    %900 = vmatpush2.msra.mxu0 0.0
    %901 = vmatprep.subr.mxu0 0.0
    %902 = vmatpush2.msra.mxu0 0.0
    %903 = vmatprep.subr.mxu0 0.0
    %904 = vmatpush2.msra.mxu0 0.0
    %905 = vmatprep.subr.mxu0 0.0
    %906 = vmatpush2.msra.mxu0 0.0
    %907 = vmatprep.subr.mxu0 0.0
    %908 = vmatpush2.msra.mxu0 0.0
    %909 = vmatprep.subr.mxu0 0.0
    %910 = vmatpush2.msra.mxu0 0.0
    %911 = vmatprep.mubr.f32.mxu0 0.0
    %912 = vmatmul.mubr.f32.gmra.mxu0 %v821
    %v913 = vpop.f32.mrf.mxu0
    %v914 = vadd.f32 0.0, %v913
    %v915 = vpop.f32.mrf.mxu0
    %916 = vmatprep.mubr.f32.mxu0 0.0
    %917 = vmatmul.mubr.f32.gmra.mxu0 %v824
    %v918 = vpop.f32.mrf.mxu0
    %v919 = vadd.f32 0.0, %v918
    %v920 = vpop.f32.mrf.mxu0
    %921 = vmatprep.mubr.f32.mxu0 0.0
    %922 = vmatmul.mubr.f32.gmra.mxu0 %v827
    %v923 = vpop.f32.mrf.mxu0
    %v924 = vadd.f32 0.0, %v923
    %v925 = vpop.f32.mrf.mxu0
    %926 = vmatprep.mubr.f32.mxu0 0.0
    %927 = vmatmul.mubr.f32.gmra.mxu0 %v830
    %v928 = vpop.f32.mrf.mxu0
    %v929 = vadd.f32 0.0, %v928
    %v930 = vpop.f32.mrf.mxu0
    %931 = vmatprep.mubr.f32.mxu0 0.0
    %932 = vmatmul.mubr.f32.gmra.mxu0 %v833
    %v933 = vpop.f32.mrf.mxu0
    %v934 = vadd.f32 0.0, %v933
    %v935 = vpop.f32.mrf.mxu0
    %936 = vmatprep.mubr.f32.mxu0 0.0
    %937 = vmatmul.mubr.f32.gmra.mxu0 %v836
    %v938 = vpop.f32.mrf.mxu0
    %v939 = vadd.f32 0.0, %v938
    %v940 = vpop.f32.mrf.mxu0
    %941 = vmatprep.mubr.f32.mxu0 0.0
    %942 = vmatmul.mubr.f32.gmra.mxu0 %v839
    %v943 = vpop.f32.mrf.mxu0
    %v944 = vadd.f32 0.0, %v943
    %v945 = vpop.f32.mrf.mxu0
    %946 = vmatprep.mubr.f32.mxu0 0.0
    %947 = vmatmul.mubr.f32.gmra.mxu0 %v842
    %v948 = vpop.f32.mrf.mxu0
    %v949 = vadd.f32 0.0, %v948
    %v950 = vpop.f32.mrf.mxu0
    %951 = vdwg.mxu0
    %vm952 = vcmask 465920
    %v953 = vsel %vm952, %v914, inf
    %954 = vmin.xlane.f32.xlu0 %v953
    %v955 = vpop.xlane.xlu0 %954
    %v956 = vsel %vm952, %v919, inf
    %957 = vmin.xlane.f32.xlu0 %v956
    %v958 = vpop.xlane.xlu0 %957
    %v959 = vsel %vm952, %v924, inf
    %960 = vmin.xlane.f32.xlu0 %v959
    %v961 = vpop.xlane.xlu0 %960
    %v962 = vsel %vm952, %v929, inf
    %963 = vmin.xlane.f32.xlu0 %v962
    %v964 = vpop.xlane.xlu0 %963
    %v965 = vsel %vm952, %v934, inf
    %966 = vmin.xlane.f32.xlu0 %v965
    %v967 = vpop.xlane.xlu0 %966
    %v968 = vsel %vm952, %v939, inf
    %969 = vmin.xlane.f32.xlu0 %v968
    %v970 = vpop.xlane.xlu0 %969
    %v971 = vsel %vm952, %v944, inf
    %972 = vmin.xlane.f32.xlu0 %v971
    %v973 = vpop.xlane.xlu0 %972
    %vm974 = vcmask 458752
    %v975 = vsel %vm974, %v949, inf
    %976 = vmin.xlane.f32.xlu0 %v975
    %v977 = vpop.xlane.xlu0 %976
    %v978 = vmin.f32 %v955, %v967
    %v979 = vmin.f32 %v958, %v970
    %v980 = vmin.f32 %v961, %v973
    %vm981 = vcmask 1040384
    %v982 = vsel %vm981, %v977, inf
    %v983 = vmin.f32 %v964, %v982
    %v984 = vmin.f32 %v978, %v979
    %v985 = vmin.f32 %v980, %v983
    %v986 = vmin.f32 %v984, %v985
    %v987 = vrot.slane %v986, 4
    %v988 = vmin.f32 %v986, %v987
    %v989 = vrot.slane %v988, 2
    %v990 = vmin.f32 %v988, %v989
    %v991 = vrot.slane %v990, 1
    %v992 = vmin.f32 %v990, %v991
    %v993 = vsel %vm952, %v914, -inf
    %994 = vmax.xlane.f32.xlu0 %v993
    %v995 = vpop.xlane.xlu0 %994
    %v996 = vsel %vm952, %v919, -inf
    %997 = vmax.xlane.f32.xlu0 %v996
    %v998 = vpop.xlane.xlu0 %997
    %v999 = vsel %vm952, %v924, -inf
    %1000 = vmax.xlane.f32.xlu0 %v999
    %v1001 = vpop.xlane.xlu0 %1000
    %v1002 = vsel %vm952, %v929, -inf
    %1003 = vmax.xlane.f32.xlu0 %v1002
    %v1004 = vpop.xlane.xlu0 %1003
    %v1005 = vsel %vm952, %v934, -inf
    %1006 = vmax.xlane.f32.xlu0 %v1005
    %v1007 = vpop.xlane.xlu0 %1006
    %v1008 = vsel %vm952, %v939, -inf
    %1009 = vmax.xlane.f32.xlu0 %v1008
    %v1010 = vpop.xlane.xlu0 %1009
    %v1011 = vsel %vm952, %v944, -inf
    %1012 = vmax.xlane.f32.xlu0 %v1011
    %v1013 = vpop.xlane.xlu0 %1012
    %v1014 = vsel %vm974, %v949, -inf
    %1015 = vmax.xlane.f32.xlu0 %v1014
    %v1016 = vpop.xlane.xlu0 %1015
    %v1017 = vmax.f32 %v995, %v1007
    %v1018 = vmax.f32 %v998, %v1010
    %v1019 = vmax.f32 %v1001, %v1013
    %v1020 = vsel %vm981, %v1016, -inf
    %v1021 = vmax.f32 %v1004, %v1020
    %v1022 = vmax.f32 %v1017, %v1018
    %v1023 = vmax.f32 %v1019, %v1021
    %v1024 = vmax.f32 %v1022, %v1023
    %v1025 = vrot.slane %v1024, 4
    %v1026 = vmax.f32 %v1024, %v1025
    %v1027 = vrot.slane %v1026, 2
    %v1028 = vmax.f32 %v1026, %v1027
    %v1029 = vrot.slane %v1028, 1
    %v1030 = vmax.f32 %v1028, %v1029
    %v1031 = vsub.f32 %v1030, %v992
    %v1032 = vrcp.pop %v1031
    %v1033 = vmul.f32 1.0, %v1032
    %v1034 = vsub.f32 %v914, %v992
    %v1035 = vsub.f32 %v919, %v992
    %v1036 = vsub.f32 %v924, %v992
    %v1037 = vsub.f32 %v929, %v992
    %v1038 = vsub.f32 %v934, %v992
    %v1039 = vsub.f32 %v939, %v992
    %v1040 = vsub.f32 %v944, %v992
    %v1041 = vsub.f32 %v949, %v992
    %v1042 = vmul.f32 %v1034, %v1033
    %v1043 = vmul.f32 %v1035, %v1033
    %v1044 = vmul.f32 %v1036, %v1033
    %v1045 = vmul.f32 %v1037, %v1033
    %v1046 = vmul.f32 %v1038, %v1033
    %v1047 = vmul.f32 %v1039, %v1033
    %v1048 = vmul.f32 %v1040, %v1033
    %v1049 = vmul.f32 %v1041, %v1033
    %s1050 = smul.u32 %s105, 192
    %s1051 = scalar_lea.vmem %s3, %s1050
    %1052 = vst.msk [vmem:[%s1051] sm:$0xff] %vm952, %v1042
    %1053 = vst.msk [vmem:[%s1051 + $0x8] sm:$0xff] %vm952, %v1043
    %1054 = vst.msk [vmem:[%s1051 + $0x10] sm:$0xff] %vm952, %v1044
    %1055 = vst.msk [vmem:[%s1051 + $0x18] sm:$0xff] %vm952, %v1045
    %1056 = vst.msk [vmem:[%s1051 + $0x20] sm:$0xff] %vm952, %v1046
    %1057 = vst.msk [vmem:[%s1051 + $0x28] sm:$0xff] %vm952, %v1047
    %1058 = vst.msk [vmem:[%s1051 + $0x30] sm:$0xff] %vm952, %v1048
    %1059 = vst.msk [vmem:[%s1051 + $0x38] sm:$0x1] %vm974, %v1049
    %1060 = vst.msk [vmem:[%s1051 + $0x40] sm:$0xff] %vm952, %v1042
    %1061 = vst.msk [vmem:[%s1051 + $0x48] sm:$0xff] %vm952, %v1043
    %1062 = vst.msk [vmem:[%s1051 + $0x50] sm:$0xff] %vm952, %v1044
    %1063 = vst.msk [vmem:[%s1051 + $0x58] sm:$0xff] %vm952, %v1045
    %1064 = vst.msk [vmem:[%s1051 + $0x60] sm:$0xff] %vm952, %v1046
    %1065 = vst.msk [vmem:[%s1051 + $0x68] sm:$0xff] %vm952, %v1047
    %1066 = vst.msk [vmem:[%s1051 + $0x70] sm:$0xff] %vm952, %v1048
    %1067 = vst.msk [vmem:[%s1051 + $0x78] sm:$0x1] %vm974, %v1049
    %1068 = vst.msk [vmem:[%s1051 + $0x80] sm:$0xff] %vm952, %v1042
    %1069 = vst.msk [vmem:[%s1051 + $0x88] sm:$0xff] %vm952, %v1043
    %1070 = vst.msk [vmem:[%s1051 + $0x90] sm:$0xff] %vm952, %v1044
    %1071 = vst.msk [vmem:[%s1051 + $0x98] sm:$0xff] %vm952, %v1045
    %1072 = vst.msk [vmem:[%s1051 + $0xa0] sm:$0xff] %vm952, %v1046
    %1073 = vst.msk [vmem:[%s1051 + $0xa8] sm:$0xff] %vm952, %v1047
    %1074 = vst.msk [vmem:[%s1051 + $0xb0] sm:$0xff] %vm952, %v1048
    %1075 = vst.msk [vmem:[%s1051 + $0xb8] sm:$0x1] %vm974, %v1049
  $region18: #{_lambda_.1} parent=0 // loop_footer
    %s109 = sadd.s32 1, %s105
  $region19: #{_lambda_.1} parent=0 // loop_footer_branch
    %104 = sbr.rel target = $region15
  $region20: #{_lambda_.1} parent=0 // loop_exit
    _
  // Predicated region
  $region21: #{_lambda_.1} parent=0 // pred_check
    _
  $region22: #{_lambda_.1} parent=0 // pred_check_branch
    %1077 = sbr.rel (0) target = $region24
  $region23: #{_lambda_.1} parent=0 // pred_region
    _
  $region24: #{_lambda_.1} parent=0 // pred_fallthru
    _
  // Predicated region
  $region25: #{_lambda_.1} parent=0 // pred_check
    _
  $region26: #{_lambda_.1} parent=0 // pred_check_branch
    %1079 = sbr.rel (0) target = $region28
  $region27: #{_lambda_.1} parent=0 // pred_region
    _
  $region28: #{_lambda_.1} parent=0 // pred_fallthru
    _

</llo_original>
